<compile_context>
chip_gen: v5e
topology: v5e:2x2
jax: 0.10.0
libtpu: 0.0.40
codegen_flags: <defaults>
</compile_context>

<pallas_src>
import jax
import jax.numpy as jnp
from jax.experimental import pallas as pl
from jax.experimental.pallas import tpu as pltpu

_LANE = 128                      # lane width of a vreg; last block dim multiple of this
_TWO_STEP_BYTES = 2 * 1024 * 1024  # above this, force >=2 grid steps (core split fodder)

_CORE_PARALLEL_OK = None  # cached result of the CORE_PARALLEL lowering probe


def _round_up(x: int, m: int) -> int:
    return ((x + m - 1) // m) * m


def _score_cap_kernel(cap_ref, x_ref, o_ref):
    # Elementwise upper clip, matching torch.clip(input, max=cap).
    # Compare in f32 and cast back: for bf16/f16 inputs this follows the promoted
    # compare (x is exact in f32) instead of comparing against a pre-rounded cap.
    cap = cap_ref[0, 0]  # f32 scalar in SMEM
    o_ref[...] = jnp.minimum(x_ref[...].astype(jnp.float32), cap).astype(o_ref.dtype)


def _probe_copy_kernel(x_ref, o_ref):
    o_ref[...] = x_ref[...]


def _core_semantics():
    """Grid-axis semantics for the elementwise loop.

    Only CORE_PARALLEL actually splits a grid axis across TensorCores (2 on v7x);
    plain "parallel" is measured to be equivalent to "arbitrary".  Support is probed
    once with a tiny copy kernel (including a partial edge block) and cached; on any
    failure we fall back to "arbitrary" so the kernel always runs.
    """
    global _CORE_PARALLEL_OK
    core_parallel = getattr(pltpu, "CORE_PARALLEL", None)
    if core_parallel is None:
        return ("arbitrary",)
    if _CORE_PARALLEL_OK is None:
        try:
            x = jnp.arange(12 * _LANE, dtype=jnp.float32).reshape(12, _LANE)
            y = pl.pallas_call(
                _probe_copy_kernel,
                out_shape=jax.ShapeDtypeStruct(x.shape, x.dtype),
                grid_spec=pltpu.PrefetchScalarGridSpec(
                    num_scalar_prefetch=0,
                    grid=(2,),  # second block is a partial (masked) edge block
                    in_specs=[pl.BlockSpec((8, _LANE), lambda i: (i, 0))],
                    out_specs=pl.BlockSpec((8, _LANE), lambda i: (i, 0)),
                ),
                compiler_params=pltpu.CompilerParams(
                    dimension_semantics=(core_parallel,)),
            )(x)
            _CORE_PARALLEL_OK = bool(jnp.array_equal(jax.block_until_ready(y), x))
        except Exception:  # lowering/runtime not supported on this chip / release
            _CORE_PARALLEL_OK = False
    return (core_parallel,) if _CORE_PARALLEL_OK else ("arbitrary",)


def score_cap(x: jax.Array, cap, *, tile_rows: int = 8192,
              donate_input: bool = False) -> jax.Array:
    """out = min(x, cap) elementwise (== torch.clip(input, max=cap)) via Pallas.

    `tile_rows` is the f32 row count per block; it is scaled by dtype so each block
    stays ~4 MiB (8192 x 128 f32 / 16384 x 128 bf16).  v7x callers chasing the last
    few percent of HBM roofline can pass tile_rows=16384 (8 MiB blocks, 32 MiB
    double-buffered in+out, still under the 48 MiB vmem limit / 64 MiB physical
    VMEM).  Set donate_input=True only when the caller actually donates x (e.g. via
    jit donate_argnums); it maps to input_output_aliases={1: 0}.
    """
    orig_shape = x.shape
    orig_dtype = x.dtype
    if not jnp.issubdtype(orig_dtype, jnp.floating):
        # TODO(synk): integer clip needs torch's type-promotion semantics pinned down.
        raise NotImplementedError("score_cap only supports floating-point inputs")

    cap_f32 = jnp.asarray(cap, dtype=jnp.float32)
    n = x.size
    flat = x.reshape(-1)

    n_aligned = n - (n % _LANE)
    if n_aligned == 0:
        # Tiny (<128-element) input: a kernel launch is pure overhead.
        out = jnp.minimum(flat.astype(jnp.float32), cap_f32).astype(orig_dtype)
        return out.reshape(orig_shape)

    rows = n_aligned // _LANE
    x2d = flat[:n_aligned].reshape(rows, _LANE)

    itemsize = jnp.dtype(orig_dtype).itemsize
    pack = 8 * max(1, 4 // itemsize)                       # sublane packing: 8/16/32
    tile_rows = max(pack, _round_up(tile_rows * max(1, 4 // itemsize), pack))

    if rows > tile_rows:
        tile = tile_rows
    elif rows >= 2 * pack and rows * _LANE * itemsize >= _TWO_STEP_BYTES:
        # Mid-size input: force >=2 grid steps so a core-parallel split has work.
        tile = _round_up(pl.cdiv(rows, 2), pack)
    else:
        tile = rows                                        # full-array block (legal)
    grid = (pl.cdiv(rows, tile),)

    dim_sem = _core_semantics() if grid[0] > 1 else ("arbitrary",)

    out2d = pl.pallas_call(
        _score_cap_kernel,
        out_shape=jax.ShapeDtypeStruct((rows, _LANE), orig_dtype),
        grid_spec=pltpu.PrefetchScalarGridSpec(
            num_scalar_prefetch=0,
            grid=grid,
            in_specs=[
                pl.BlockSpec(memory_space=pltpu.MemorySpace.SMEM),  # cap (1,1) f32
                pl.BlockSpec((tile, _LANE), lambda i: (i, 0)),      # x tile
            ],
            out_specs=pl.BlockSpec((tile, _LANE), lambda i: (i, 0)),
        ),
        compiler_params=pltpu.CompilerParams(
            dimension_semantics=dim_sem,
            vmem_limit_bytes=48 * 1024 * 1024,   # room for 8 MiB blocks, < v7x 64 MiB
        ),
        cost_estimate=pl.CostEstimate(
            flops=rows * _LANE,
            transcendentals=0,
            bytes_accessed=2 * rows * _LANE * itemsize,
        ),
        input_output_aliases={1: 0} if donate_input else {},
    )(cap_f32.reshape(1, 1), x2d)

    out_flat = out2d.reshape(-1)
    if n_aligned != n:
        # <=127-element tail clipped in plain JAX — no pad/slice full-tensor copies.
        tail = jnp.minimum(flat[n_aligned:].astype(jnp.float32), cap_f32)
        out_flat = jnp.concatenate([out_flat, tail.astype(orig_dtype)])
    return out_flat.reshape(orig_shape)


if __name__ == "__main__":
    # ScoreCap has no learnable parameters; only the static `cap` value.
    cap = 0.5
    key = jax.random.PRNGKey(0)
    k1, k2, k3, k4 = jax.random.split(key, 4)

    # 1) Shape implied by the module's usage (NCHW activations): 2 x 4 x 16 x 16.
    x = jax.random.normal(k1, (2, 4, 16, 16), dtype=jnp.float32)
    ref = jnp.minimum(x, cap)
    out = jax.block_until_ready(score_cap(x, cap))
    assert out.shape == x.shape and out.dtype == x.dtype
    assert jnp.allclose(out, ref), "mismatch (default single-block path)"

    # 2) Multi-block path (grid > 1) — also exercises the CORE_PARALLEL probe/fallback.
    out_tiled = jax.block_until_ready(score_cap(x, cap, tile_rows=8))
    assert jnp.allclose(out_tiled, ref), "mismatch (tiled path)"

    # 3) Non-lane-aligned shape with an aligned prefix: kernel + jnp-tail stitch.
    y = jax.random.normal(k2, (5, 131), dtype=jnp.float32)
    out_y = jax.block_until_ready(score_cap(y, cap))
    assert jnp.allclose(out_y, jnp.minimum(y, cap)), "mismatch (prefix+tail path)"

    # 4) Tiny (<128 element) input: pure-JAX fallback, no kernel launch.
    z = jax.random.normal(k3, (3, 5, 7), dtype=jnp.float32)
    out_z = jax.block_until_ready(score_cap(z, cap))
    assert jnp.allclose(out_z, jnp.minimum(z, cap)), "mismatch (tiny fallback)"

    # 5) bf16 input: dtype-scaled tile + promoted (f32) compare semantics.
    w = jax.random.normal(k4, (4, 256), dtype=jnp.bfloat16)
    out_w = jax.block_until_ready(score_cap(w, cap))
    ref_w = jnp.minimum(w.astype(jnp.float32), jnp.float32(cap)).astype(jnp.bfloat16)
    assert out_w.dtype == jnp.bfloat16 and jnp.array_equal(out_w, ref_w), "mismatch (bf16)"

    # 6) Donated-input path (input_output_aliases={1: 0}).
    d = jax.random.normal(k1, (16, 128), dtype=jnp.float32)
    out_d = jax.block_until_ready(score_cap(d, cap, donate_input=True))
    assert jnp.allclose(out_d, jnp.minimum(d, cap)), "mismatch (donated-input path)"

    print("KERNEL_OK")
</pallas_src>

<mosaic_0001>
module attributes {stable_mosaic.version = 11 : i64} {
  func.func @_score_cap_kernel(%arg0: i32, %arg1: memref<1x1xf32, #tpu.memory_space<smem>>, %arg2: memref<16x128xf32, #tpu.memory_space<vmem>>, %arg3: memref<16x128xf32, #tpu.memory_space<vmem>>) attributes {dimension_semantics = [#tpu.dimension_semantics<arbitrary>], iteration_bounds = array<i64: 1>, scalar_prefetch = 0 : i64, scratch_operands = 0 : i64, tpu.core_type = #tpu.core_type<tc>, window_params = [{transform_indices = @transform_0, window_bounds = array<i64: 1, 1>}, {transform_indices = @transform_1, window_bounds = array<i64: 16, 128>}, {transform_indices = @transform_2, window_bounds = array<i64: 16, 128>}]} {
    %c0 = arith.constant 0 : index
    %c0_0 = arith.constant 0 : index
    %0 = memref.load %arg1[%c0, %c0_0] : memref<1x1xf32, #tpu.memory_space<smem>>
    %c0_1 = arith.constant 0 : index
    %c0_2 = arith.constant 0 : index
    %1 = vector.load %arg2[%c0_1, %c0_2] : memref<16x128xf32, #tpu.memory_space<vmem>>, vector<16x128xf32>
    %2 = vector.broadcast %0 : f32 to vector<16x128xf32>
    %3 = arith.minimumf %1, %2 : vector<16x128xf32>
    %c0_3 = arith.constant 0 : index
    %c0_4 = arith.constant 0 : index
    %4 = vector.load %arg3[%c0_3, %c0_4] : memref<16x128xf32, #tpu.memory_space<vmem>>, vector<16x128xf32>
    tpu.vector_store %arg3[%c0_3, %c0_4], %3 {strides = array<i32>} : memref<16x128xf32, #tpu.memory_space<vmem>>, vector<16x128xf32>,
    return
  }
  func.func @transform_0(%arg0: i32) -> (i32, i32) {
    %c0_i32 = arith.constant 0 : i32
    %c0_i32_0 = arith.constant 0 : i32
    %c0_i32_1 = arith.constant 0 : i32
    return %c0_i32, %c0_i32_0 : i32, i32
  }
  func.func @transform_1(%arg0: i32) -> (i32, i32) {
    %c0_i32 = arith.constant 0 : i32
    %c0_i32_0 = arith.constant 0 : i32
    return %arg0, %c0_i32 : i32, i32
  }
  func.func @transform_2(%arg0: i32) -> (i32, i32) {
    %c0_i32 = arith.constant 0 : i32
    %c0_i32_0 = arith.constant 0 : i32
    return %arg0, %c0_i32 : i32, i32
  }
}

</mosaic_0001>

<llo_original>
// kernel: tpu_custom_call.1
$region0: #{tpu_custom_call.1}
  #allocation0 [shape = 'u32[]', space=smem, size = 0x4, offset = 0x4, fixed_abs, tag = 'smem constant byte address 0x4 - core index']
  #allocation1 [shape = 'u32[72,128]{1,0:T(1,128)}', space=vmem, size = 0x9000, scoped, tag = 'internal scratch']
  #allocation2 [shape = 'f32[1,1]{1,0:T(1,128)S(6)}', space=smem, size = 0x200, scoped, tag = 'scoped memory for tpu_custom_call.1']
  %s0 = inlined_call_operand.<no memory space> [shape: f32[1,1], index: 0, kind: input, shape index: {}]
  %s1 = inlined_call_operand.hbm [shape: f32[16,128], index: 1, kind: input, shape index: {}]
  %s2 = inlined_call_operand.hbm [shape: f32[16,128], index: 2, kind: output, shape index: {}]
  %s3 = sld [smem:[#allocation0]]
  $region22: #{tpu_custom_call.1} parent=0
    _
  %s5 = ssub.s32 1, %s3
  %s6 = scalar_select 0, %s5, %s3
  %7 = sst [smem:[#allocation2]] %s0
  $region1: #{tpu_custom_call.1} parent=0
    #allocation3 [shape = 'u8[8192]{0}', space=vmem, size = 0x2000, scoped, tag = 'input window, operand 1, single buffered']
    #allocation4 [shape = 's32[1]{0}', space=sflag, size = 0x4, scoped, tag = 'scoped memory for tpu_custom_call.1']
    #allocation5 [shape = 's32[1]{0}', space=sflag, size = 0x4, scoped, tag = 'scoped memory for tpu_custom_call.1']
    #allocation6 [shape = 'u8[8192]{0}', space=vmem, size = 0x2000, scoped, tag = 'output window, operand 0, single buffered']
    %8 = vsyncpa [#allocation4], 0
    %9 = vsyncpa [#allocation5], 0
    // Predicated region
    $region2: #{tpu_custom_call.1} parent=1 // pred_check
      _
    $region3: #{tpu_custom_call.1} parent=1 // pred_check_branch
      %11 = sbr.rel (0) target = $region5
    $region4: #{tpu_custom_call.1} parent=1 // pred_region
      _
    $region5: #{tpu_custom_call.1} parent=1 // pred_fallthru
      _
    // Predicated region
    $region6: #{tpu_custom_call.1} parent=1 // pred_check
      _
    $region7: #{tpu_custom_call.1} parent=1 // pred_check_branch
      %13 = sbr.rel (0) target = $region9
    $region8: #{tpu_custom_call.1} parent=1 // pred_region
      %15 = vsyncadd [#allocation4], 0
      %s16 = sshll.u32 %s1, 4
      %s17 = int_to_ptr.hbm [resolvable:$true] %s16
      %s18 = sshll.u32 [#allocation3], 4
      %s19 = int_to_ptr.vmem [resolvable:$true] %s18
      %24 = dma.hbm_to_vmem [thread:$0]  %s17, 256, %s19, [#allocation4], 128, 128, 8
    $region9: #{tpu_custom_call.1} parent=1 // pred_fallthru
      _
    // Predicated region
    $region10: #{tpu_custom_call.1} parent=1 // pred_check
      _
    $region11: #{tpu_custom_call.1} parent=1 // pred_check_branch
      %26 = sbr.rel (0) target = $region13
    $region12: #{tpu_custom_call.1} parent=1 // pred_region
      %28 = dma.done [#allocation4], 256
    $region13: #{tpu_custom_call.1} parent=1 // pred_fallthru
      _
    %s29 = sld [smem:[#allocation2]]
    %v30 = vld [vmem:[#allocation3] sm:$0xff]
    %v31 = vld [vmem:[#allocation3 + $0x8] sm:$0xff]
    %v32 = vstv %s29
    %v33 = vmin.f32 %v30, %v32
    %v34 = vmin.f32 %v31, %v32
    %35 = vst [vmem:[#allocation6] sm:$0xff] %v33
    %36 = vst [vmem:[#allocation6 + $0x8] sm:$0xff] %v34
    // Predicated region
    $region14: #{tpu_custom_call.1} parent=1 // pred_check
      _
    $region15: #{tpu_custom_call.1} parent=1 // pred_check_branch
      %38 = sbr.rel (0) target = $region17
    $region16: #{tpu_custom_call.1} parent=1 // pred_region
      %40 = vsyncadd [#allocation5], 0
      %s41 = sshll.u32 [#allocation6], 4
      %s42 = int_to_ptr.vmem [resolvable:$true] %s41
      %s43 = sshll.u32 %s2, 4
      %s44 = int_to_ptr.hbm [resolvable:$true] %s43
      %49 = dma.vmem_to_hbm [thread:$0]  %s42, 256, %s44, [#allocation5], 128, 128, 8
    $region17: #{tpu_custom_call.1} parent=1 // pred_fallthru
      _
    // Predicated region
    $region18: #{tpu_custom_call.1} parent=1 // pred_check
      _
    $region19: #{tpu_custom_call.1} parent=1 // pred_check_branch
      %51 = sbr.rel (0) target = $region21
    $region20: #{tpu_custom_call.1} parent=1 // pred_region
      %53 = dma.done [#allocation5], 256
    $region21: #{tpu_custom_call.1} parent=1 // pred_fallthru
      _
    %54 = vsyncpa [#allocation4], 1
    %55 = vsyncpa [#allocation5], 1

</llo_original>
